<compile_context>
chip_gen: v5e
topology: v5e:2x2
jax: 0.10.0
libtpu: 0.0.40
codegen_flags: <defaults>
</compile_context>

<pallas_src>
import jax
import jax.numpy as jnp
from jax.experimental import pallas as pl
from jax.experimental.pallas import tpu as pltpu

_LANE = 128


def _round_up(a, b):
    return (a + b - 1) // b * b


def _cdiv(a, b):
    return (a + b - 1) // b


def _make_lrn_kernel(*, nb, local_size, alpha, beta, k):
    coef = alpha / local_size  # AvgPool divides by local_size everywhere (count_include_pad)

    def kernel(*refs):
        if local_size > 1:
            band_ref, x_ref, o_ref = refs
            band = band_ref[...]                 # resident (C, C) off-diagonal window matrix
        else:
            x_ref, o_ref = refs

        for b in range(nb):                      # static unroll over batch rows in the block
            x = x_ref[b].astype(jnp.float32)     # (C, TILE)
            x2 = x * x
            if local_size > 1:
                if band.dtype == jnp.float32:    # precise path
                    neigh = jnp.dot(band, x2, preferred_element_type=jnp.float32,
                                    precision=jax.lax.Precision.HIGHEST)
                else:                            # fast path: single-pass bf16 MXU
                    neigh = jnp.dot(band, x2.astype(band.dtype),
                                    preferred_element_type=jnp.float32)
                s = x2 + neigh                   # exact f32 diagonal + neighbor terms
            else:
                s = x2
            o_ref[b] = (x * jnp.power(coef * s + k, -beta)).astype(o_ref.dtype)

    return kernel


def spatial_cross_map_lrn(x, local_size=1, alpha=1.0, beta=0.75, k=1.0, *,
                          tile_hw=4096, block_bytes=2 * 1024 * 1024,
                          precise=False, vmem_limit_bytes=None):
    """x: (N, C, H, W). Across-channel LRN identical to the PyTorch module forward."""
    assert local_size >= 1 and local_size % 2 == 1, "local_size must be odd"
    N, C, H, W = x.shape
    HW = H * W
    x3 = x.reshape(N, C, HW)

    # --- spatial tile selection (lane-dense, never overhanging the array) -------------
    if HW % _LANE == 0:
        max_tile_hw = HW
    elif HW > _LANE:
        max_tile_hw = (HW // _LANE) * _LANE      # ragged (masked) last block, no overhang
    else:
        max_tile_hw = HW                         # tiny map: single full-extent block
    max_tile_bytes = max(_LANE, (int(block_bytes) // (C * 4)) // _LANE * _LANE)
    tile = max(1, min(max_tile_hw, _round_up(int(tile_hw), _LANE), max_tile_bytes))
    # Balance tiles so the masked remainder is < 128 lanes (only for lane-aligned tiles).
    if tile % _LANE == 0:
        n_tiles = _cdiv(HW, tile)
        if n_tiles > 1:
            tile = _round_up(_cdiv(HW, n_tiles), _LANE)
    grid_hw = _cdiv(HW, tile)

    # --- batch blocking for small feature maps ----------------------------------------
    nb = 1
    if grid_hw == 1 and N > 1:
        per_row = C * tile * 4
        nb = max(1, min(N, int(block_bytes) // per_row))
        if nb >= N:                              # keep >= 2 grid steps (v7x has 2 TCs)
            nb = _cdiv(N, 2)
    grid_n = _cdiv(N, nb)

    # Single-step grid with a splittable tile: split HW so both v7x cores get work.
    if grid_n == 1 and grid_hw == 1 and tile > _LANE and tile % _LANE == 0:
        tile = _round_up(_cdiv(HW, 2), _LANE)
        grid_hw = _cdiv(HW, tile)

    # --- inputs / specs ----------------------------------------------------------------
    pad = (local_size - 1) // 2                  # matches int((local_size - 1.0) / 2)
    in_specs = []
    args = []
    if local_size > 1:
        # Banded 0/1 matrix (off-diagonal only), built once in the wrapper; zero-padding
        # semantics of AvgPool3d fall out naturally (out-of-range channels don't exist).
        ci = jnp.arange(C, dtype=jnp.int32)[:, None]
        cj = jnp.arange(C, dtype=jnp.int32)[None, :]
        d = jnp.abs(ci - cj)
        band_dtype = jnp.float32 if precise else jnp.bfloat16
        band_off = ((d <= pad) & (d > 0)).astype(band_dtype)
        in_specs.append(pl.BlockSpec((C, C), lambda n, t: (0, 0)))   # resident block
        args.append(band_off)
    in_specs.append(pl.BlockSpec((nb, C, tile), lambda n, t: (n, 0, t)))
    args.append(x3)

    kernel = _make_lrn_kernel(nb=nb, local_size=int(local_size), alpha=float(alpha),
                              beta=float(beta), k=float(k))

    itemsize = jnp.dtype(x.dtype).itemsize
    win_flops = 2 * C if local_size > 1 else 0
    cost = pl.CostEstimate(
        flops=(win_flops + 6) * N * C * HW,
        transcendentals=2 * N * C * HW,          # log + exp inside the power
        bytes_accessed=2 * itemsize * N * C * HW,
    )

    cparams = dict(dimension_semantics=("parallel", "parallel"))
    if vmem_limit_bytes is not None:
        cparams["vmem_limit_bytes"] = int(vmem_limit_bytes)

    out = pl.pallas_call(
        kernel,
        out_shape=jax.ShapeDtypeStruct((N, C, HW), x.dtype),
        grid=(grid_n, grid_hw),
        in_specs=in_specs,
        out_specs=pl.BlockSpec((nb, C, tile), lambda n, t: (n, 0, t)),
        compiler_params=pltpu.CompilerParams(**cparams),
        cost_estimate=cost,
    )(*args)

    return out.reshape(N, C, H, W)


def _lrn_reference(x, local_size, alpha, beta, k):
    """Pure-JAX reference mirroring the PyTorch forward (full f32)."""
    N, C, H, W = x.shape
    pad = (local_size - 1) // 2
    x2 = x * x
    x2p = jnp.pad(x2, ((0, 0), (pad, pad), (0, 0), (0, 0)))
    s = sum(x2p[:, j:j + C] for j in range(local_size))
    div = (alpha * (s / local_size) + k) ** beta
    return x / div


def _check(x, local_size, alpha, beta, k, **kw):
    out = spatial_cross_map_lrn(x, local_size=local_size, alpha=alpha, beta=beta, k=k, **kw)
    out = jax.block_until_ready(out)
    ref = _lrn_reference(x, local_size, alpha, beta, k)
    assert out.shape == x.shape and out.dtype == x.dtype
    err = jnp.max(jnp.abs(out - ref))
    assert jnp.allclose(out, ref, atol=2e-5, rtol=2e-5), f"mismatch vs reference, max err {err}"


if __name__ == "__main__":
    key = jax.random.PRNGKey(0)
    k0, k1, k2 = jax.random.split(key, 3)

    # VGG_M-style LRN parameters; HW a multiple of 128, 2-step parallel grid.
    x = jax.random.normal(k0, (2, 4, 16, 16), dtype=jnp.float32)
    _check(x, local_size=3, alpha=5e-4, beta=0.75, k=2.0)

    # Degenerate window (module __init__ defaults): local_size=1 (no band input at all).
    _check(x, local_size=1, alpha=1.0, beta=0.75, k=1.0)

    # HW not a multiple of 128: ragged (masked) last spatial block + multi-tile grid.
    y = jax.random.normal(k1, (1, 5, 24, 24), dtype=jnp.float32)
    _check(y, local_size=5, alpha=1e-3, beta=0.75, k=2.0, tile_hw=128)
    # Same input through the default auto-tiling path (single-image tile split in two).
    _check(y, local_size=5, alpha=1e-3, beta=0.75, k=2.0)

    # Several batch rows per block + masked batch remainder (N=3 -> NB=2, grid_n=2).
    z = jax.random.normal(k2, (3, 4, 8, 16), dtype=jnp.float32)
    _check(z, local_size=3, alpha=5e-4, beta=0.75, k=2.0)

    print("KERNEL_OK")
</pallas_src>

<mosaic_0001>
module attributes {stable_mosaic.version = 11 : i64} {
  func.func @kernel(%arg0: i32, %arg1: i32, %arg2: memref<4x4xbf16, #tpu.memory_space<vmem>>, %arg3: memref<1x4x256xf32, #tpu.memory_space<vmem>>, %arg4: memref<1x4x256xf32, #tpu.memory_space<vmem>>) attributes {dimension_semantics = [#tpu.dimension_semantics<parallel>, #tpu.dimension_semantics<parallel>], iteration_bounds = array<i64: 2, 1>, scalar_prefetch = 0 : i64, scratch_operands = 0 : i64, tpu.core_type = #tpu.core_type<tc>, window_params = [{pipeline_mode = #tpu.pipeline_mode<synchronous>, transform_indices = @transform_0, window_bounds = array<i64: 4, 4>}, {transform_indices = @transform_1, window_bounds = array<i64: 1, 4, 256>}, {transform_indices = @transform_2, window_bounds = array<i64: 1, 4, 256>}]} {
    %c0 = arith.constant 0 : index
    %c0_0 = arith.constant 0 : index
    %0 = vector.load %arg2[%c0, %c0_0] : memref<4x4xbf16, #tpu.memory_space<vmem>>, vector<4x4xbf16>
    %c0_1 = arith.constant 0 : index
    %c0_2 = arith.constant 0 : index
    %c0_3 = arith.constant 0 : index
    %1 = vector.load %arg3[%c0_1, %c0_2, %c0_3] : memref<1x4x256xf32, #tpu.memory_space<vmem>>, vector<1x4x256xf32>
    %2 = vector.shape_cast %1 : vector<1x4x256xf32> to vector<4x256xf32>
    %3 = arith.mulf %2, %2 : vector<4x256xf32>
    %4 = arith.truncf %3 : vector<4x256xf32> to vector<4x256xbf16>
    %cst = arith.constant dense<0.000000e+00> : vector<4x256xf32>
    %5 = tpu.matmul %0, %4, %cst {dimension_numbers = #tpu.dot_dimension_numbers<[1], [0], [0], [1], [0, 0, 1, 1], [], []>} : vector<4x4xbf16>, vector<4x256xbf16>, vector<4x256xf32> -> vector<4x256xf32>
    %6 = arith.addf %3, %5 : vector<4x256xf32>
    %cst_4 = arith.constant 1.66666665E-4 : f32
    %7 = vector.broadcast %cst_4 : f32 to vector<4x256xf32>
    %8 = arith.mulf %7, %6 : vector<4x256xf32>
    %cst_5 = arith.constant 2.000000e+00 : f32
    %9 = vector.broadcast %cst_5 : f32 to vector<4x256xf32>
    %10 = arith.addf %8, %9 : vector<4x256xf32>
    %cst_6 = arith.constant -7.500000e-01 : f32
    %11 = vector.broadcast %cst_6 : f32 to vector<4x256xf32>
    %12 = math.powf %10, %11 : vector<4x256xf32>
    %13 = arith.mulf %2, %12 : vector<4x256xf32>
    %c0_7 = arith.constant 0 : index
    %c0_8 = arith.constant 0 : index
    %c0_9 = arith.constant 0 : index
    %14 = vector.load %arg4[%c0_7, %c0_8, %c0_9] : memref<1x4x256xf32, #tpu.memory_space<vmem>>, vector<1x4x256xf32>
    %15 = vector.shape_cast %14 : vector<1x4x256xf32> to vector<4x256xf32>
    %16 = vector.shape_cast %13 : vector<4x256xf32> to vector<1x4x256xf32>
    tpu.vector_store %arg4[%c0_7, %c0_8, %c0_9], %16 {strides = array<i32>} : memref<1x4x256xf32, #tpu.memory_space<vmem>>, vector<1x4x256xf32>,
    return
  }
  func.func @transform_0(%arg0: i32, %arg1: i32) -> (i32, i32) {
    %c0_i32 = arith.constant 0 : i32
    %c0_i32_0 = arith.constant 0 : i32
    %c0_i32_1 = arith.constant 0 : i32
    return %c0_i32, %c0_i32_0 : i32, i32
  }
  func.func @transform_1(%arg0: i32, %arg1: i32) -> (i32, i32, i32) {
    %c0_i32 = arith.constant 0 : i32
    %c0_i32_0 = arith.constant 0 : i32
    return %arg0, %c0_i32, %arg1 : i32, i32, i32
  }
  func.func @transform_2(%arg0: i32, %arg1: i32) -> (i32, i32, i32) {
    %c0_i32 = arith.constant 0 : i32
    %c0_i32_0 = arith.constant 0 : i32
    return %arg0, %c0_i32, %arg1 : i32, i32, i32
  }
}

</mosaic_0001>

<llo_original>
// kernel: tpu_custom_call.1
$region0: #{tpu_custom_call.1}
  #allocation0 [shape = 'u32[]', space=smem, size = 0x4, offset = 0x4, fixed_abs, tag = 'smem constant byte address 0x4 - core index']
  #allocation1 [shape = 'u32[72,128]{1,0:T(1,128)}', space=vmem, size = 0x9000, scoped, tag = 'internal scratch']
  %s0 = inlined_call_operand.hbm [shape: bf16[4,4], index: 0, kind: input, shape index: {}]
  %s1 = inlined_call_operand.hbm [shape: f32[2,4,256], index: 1, kind: input, shape index: {}]
  %s2 = inlined_call_operand.hbm [shape: f32[2,4,256], index: 2, kind: output, shape index: {}]
  %s3 = sld [smem:[#allocation0]]
  $region49: #{tpu_custom_call.1} parent=0
    _
  %s5 = ssub.s32 1, %s3
  %s6 = scalar_select 0, %s5, %s3
  $region1: #{tpu_custom_call.1} parent=0
    #allocation2 [shape = 'u8[1024]{0}', space=vmem, size = 0x400, scoped, tag = 'input window, operand 0, single buffered']
    #allocation3 [shape = 's32[2]{0}', space=sflag, size = 0x8, scoped, tag = 'scoped memory for tpu_custom_call.1']
    #allocation4 [shape = 's32[2]{0}', space=sflag, size = 0x8, scoped, tag = 'scoped memory for tpu_custom_call.1']
    #allocation5 [shape = 'u8[8192]{0}', space=vmem, size = 0x2000, scoped, tag = 'input window, operand 1']
    #allocation6 [shape = 's32[2]{0}', space=sflag, size = 0x8, scoped, tag = 'scoped memory for tpu_custom_call.1']
    #allocation7 [shape = 'u8[8192]{0}', space=vmem, size = 0x2000, scoped, tag = 'output window, operand 0']
    %7 = vsyncpa [#allocation3], 0
    %8 = vsyncpa [#allocation6], 0
    %s9 = scalar_lea.sflag [#allocation6], 1
    %10 = vsyncpa %s9, 0
    %11 = vsyncpa [#allocation4], 0
    %s12 = scalar_lea.sflag [#allocation4], 1
    %13 = vsyncpa %s12, 0
    loop: start=0, step=1, limit=4
    $region2: #{tpu_custom_call.1} parent=1 // loop_pre_header
      _
    $region3: #{tpu_custom_call.1} parent=1 // loop_header
      %s15 = sphi 0, %s19
      %p16 = scmp.ge.s32.totalorder %s15, 4
      %s22 = sphi 0, %s34
      %s23 = sphi 0, %s30
      %s24 = sphi 0, %s22
      %s25 = sphi 0, %s23
      %s26 = sphi 0, %s24
      %s27 = sphi 0, %s25
      %s35 = sphi 0, %s35
      %s37 = sphi 0, %s35
      %s38 = sphi 0, %s37
      %s52 = sphi 0, %s38
      %s60 = sphi 0, %s62
      %s63 = sphi 0, %s60
      %s64 = sphi 0, %s63
      %s80 = sphi 0, %s64
      %s88 = sphi 0, %s90
      %s91 = sphi 0, %s88
      %s92 = sphi 0, %s91
      %s108 = sphi 0, %s92
    $region4: #{tpu_custom_call.1} parent=1 // loop_header_branch
      %18 = sbr.rel (%p16) target = $region8
    $region5: #{tpu_custom_call.1} parent=1 // loop_body
      %s20 = ssub.s32 %s15, 1
      %s21 = ssub.s32 %s15, 2
      %s28 = sadd.s32 1, %s23
      %p29 = scmp.ge.s32.totalorder %s28, 1
      %s30 = scalar_select %p29, 0, %s28
      %s31 = sadd.s32 1, %s22
      %s32 = scalar_select %p29, %s31, %s22
      %p33 = scmp.ge.s32.totalorder %s32, 2
      %s34 = scalar_select %p33, 0, %s32
      %s36 = sadd.s32 %s35, 1
      %p39 = scmp.eq.s32.totalorder %s15, 1
      %p40 = scmp.ne.s32.totalorder %s35, %s37
      %p41 = scmp.eq.s32.totalorder %s15, 0
      %p42 = por %p40, %p41
      %p43 = scmp.ne.s32.totalorder %s35, %s37
      %p44 = scmp.eq.s32.totalorder %s20, 1
      %p45 = por %p43, %p44
      %p46 = scmp.ne.s32.totalorder %s37, %s38
      %p47 = scmp.eq.s32.totalorder %s20, 0
      %p48 = por %p46, %p47
      %p49 = scmp.ne.s32.totalorder %s37, %s38
      %p50 = scmp.eq.s32.totalorder %s21, 1
      %p51 = por %p49, %p50
      %p53 = scmp.ne.s32.totalorder %s38, %s52
      %p54 = scmp.eq.s32.totalorder %s21, 0
      %p55 = por %p53, %p54
      %s56 = ssub.s32 %s22, %s34
      %s57 = ssub.s32 %s23, %s30
      %s58 = sor.u32 %s56, %s57
      %p59 = scmp.eq.s32.totalorder %s58, 0
      %s61 = sadd.s32 %s60, 1
      %s62 = scalar_select %p59, %s60, %s61
      %p65 = pneg %p59
      %p66 = scmp.eq.s32.totalorder %s15, 1
      %p67 = por %p65, %p66
      %p68 = scmp.ne.s32.totalorder %s60, %s63
      %p69 = scmp.eq.s32.totalorder %s15, 0
      %p70 = por %p68, %p69
      %p71 = scmp.ne.s32.totalorder %s60, %s63
      %p72 = scmp.eq.s32.totalorder %s20, 1
      %p73 = por %p71, %p72
      %p74 = scmp.ne.s32.totalorder %s63, %s64
      %p75 = scmp.eq.s32.totalorder %s20, 0
      %p76 = por %p74, %p75
      %p77 = scmp.ne.s32.totalorder %s63, %s64
      %p78 = scmp.eq.s32.totalorder %s21, 1
      %p79 = por %p77, %p78
      %p81 = scmp.ne.s32.totalorder %s64, %s80
      %p82 = scmp.eq.s32.totalorder %s21, 0
      %p83 = por %p81, %p82
      %s84 = ssub.s32 %s22, %s34
      %s85 = ssub.s32 %s23, %s30
      %s86 = sor.u32 %s84, %s85
      %p87 = scmp.eq.s32.totalorder %s86, 0
      %s89 = sadd.s32 %s88, 1
      %s90 = scalar_select %p87, %s88, %s89
      %p93 = pneg %p87
      %p94 = scmp.eq.s32.totalorder %s15, 1
      %p95 = por %p93, %p94
      %p96 = scmp.ne.s32.totalorder %s88, %s91
      %p97 = scmp.eq.s32.totalorder %s15, 0
      %p98 = por %p96, %p97
      %p99 = scmp.ne.s32.totalorder %s88, %s91
      %p100 = scmp.eq.s32.totalorder %s20, 1
      %p101 = por %p99, %p100
      %p102 = scmp.ne.s32.totalorder %s91, %s92
      %p103 = scmp.eq.s32.totalorder %s20, 0
      %p104 = por %p102, %p103
      %p105 = scmp.ne.s32.totalorder %s91, %s92
      %p106 = scmp.eq.s32.totalorder %s21, 1
      %p107 = por %p105, %p106
      %p109 = scmp.ne.s32.totalorder %s92, %s108
      %p110 = scmp.eq.s32.totalorder %s21, 0
      %p111 = por %p109, %p110
      %p112 = scmp.le.s32.totalorder 1, %s15
      %p113 = scmp.lt.s32.totalorder %s15, 3
      %p114 = pnand %p112, %p113
      %p115 = pneg %p114
      // Predicated region
      $region9: #{tpu_custom_call.1} parent=5 // pred_check
        _
      $region10: #{tpu_custom_call.1} parent=5 // pred_check_branch
        %117 = sbr.rel (%p114) target = $region12
      $region11: #{tpu_custom_call.1} parent=5 // pred_region
        %s118 = ssub.s32 %s15, 1
        // Predicated region
        $region13: #{tpu_custom_call.1} parent=11 // pred_check
          %p119 = pneg %p48
        $region14: #{tpu_custom_call.1} parent=11 // pred_check_branch
          %121 = sbr.rel (%p119) target = $region16
        $region15: #{tpu_custom_call.1} parent=11 // pred_region
          %123 = vsyncadd [#allocation3], 0
          %s125 = sshll.u32 %s0, 4
          %s126 = int_to_ptr.hbm [resolvable:$true] %s125
          %s127 = sshll.u32 [#allocation2], 4
          %s128 = int_to_ptr.vmem [resolvable:$true] %s127
          %130 = dma.hbm_to_vmem [thread:$0]  %s126, 32, %s128, [#allocation3]
        $region16: #{tpu_custom_call.1} parent=11 // pred_fallthru
          _
      $region12: #{tpu_custom_call.1} parent=5 // pred_fallthru
        _
      %p131 = scmp.lt.s32.totalorder %s15, 2
      // Predicated region
      $region17: #{tpu_custom_call.1} parent=5 // pred_check
        %p132 = pneg %p131
      $region18: #{tpu_custom_call.1} parent=5 // pred_check_branch
        %134 = sbr.rel (%p132) target = $region20
      $region19: #{tpu_custom_call.1} parent=5 // pred_region
        // Predicated region
        $region21: #{tpu_custom_call.1} parent=19 // pred_check
          %p135 = pneg %p70
        $region22: #{tpu_custom_call.1} parent=19 // pred_check_branch
          %137 = sbr.rel (%p135) target = $region24
        $region23: #{tpu_custom_call.1} parent=19 // pred_region
          %s138 = sand.u32 %s60, 1
          %s139 = scalar_lea.sflag [#allocation6], %s138
          %s140 = sand.u32 %s60, 1
          %s141 = smul.addr %s140, 8
          %s142 = scalar_lea.vmem [#allocation5], %s141
          %s143 = smul.u32 2, %s23
          %145 = vsyncadd %s139, 0
          %s146 = smul.addr %s22, 2
          %s147 = sadd.s32 %s143, %s146
          %s148 = smul.addr %s147, 4
          %s149 = scalar_lea.hbm %s1, %s148
          %s151 = sshll.u32 %s149, 4
          %s152 = int_to_ptr.hbm [resolvable:$true] %s151
          %s153 = sshll.u32 %s142, 4
          %s154 = int_to_ptr.vmem [resolvable:$true] %s153
          %156 = dma.hbm_to_vmem [thread:$0]  %s152, 128, %s154, %s139
        $region24: #{tpu_custom_call.1} parent=19 // pred_fallthru
          _
      $region20: #{tpu_custom_call.1} parent=5 // pred_fallthru
        _
      %p157 = scmp.le.s32.totalorder 1, %s15
      %p158 = scmp.lt.s32.totalorder %s15, 3
      %p159 = pnand %p157, %p158
      %p160 = pneg %p159
      // Predicated region
      $region25: #{tpu_custom_call.1} parent=5 // pred_check
        _
      $region26: #{tpu_custom_call.1} parent=5 // pred_check_branch
        %162 = sbr.rel (%p159) target = $region28
      $region27: #{tpu_custom_call.1} parent=5 // pred_region
        %s163 = ssub.s32 %s15, 1
        // Predicated region
        $region29: #{tpu_custom_call.1} parent=27 // pred_check
          %p164 = pneg %p48
        $region30: #{tpu_custom_call.1} parent=27 // pred_check_branch
          %166 = sbr.rel (%p164) target = $region32
        $region31: #{tpu_custom_call.1} parent=27 // pred_region
          %168 = dma.done [#allocation3], 32
        $region32: #{tpu_custom_call.1} parent=27 // pred_fallthru
          _
        %s169 = sand.u32 %s63, 1
        %s170 = scalar_lea.sflag [#allocation6], %s169
        %s171 = sand.u32 %s63, 1
        %s172 = smul.addr %s171, 8
        %s173 = scalar_lea.vmem [#allocation5], %s172
        // Predicated region
        $region33: #{tpu_custom_call.1} parent=27 // pred_check
          %p174 = pneg %p76
        $region34: #{tpu_custom_call.1} parent=27 // pred_check_branch
          %176 = sbr.rel (%p174) target = $region36
        $region35: #{tpu_custom_call.1} parent=27 // pred_region
          %178 = dma.done %s170, 128
        $region36: #{tpu_custom_call.1} parent=27 // pred_fallthru
          _
        %p179 = pneg %p48
        %p180 = pneg %p45
        %s181 = sand.u32 %s63, 1
        %s182 = scalar_lea.sflag [#allocation6], %s181
        %s183 = sand.u32 %s63, 1
        %s184 = smul.addr %s183, 8
        %s185 = scalar_lea.vmem [#allocation5], %s184
        %p186 = pneg %p76
        %p187 = pneg %p73
        %p188 = pneg %p104
        %p189 = pneg %p101
        %s190 = sand.u32 %s91, 1
        %s191 = scalar_lea.sflag [#allocation4], %s190
        %s192 = sand.u32 %s91, 1
        %s193 = smul.addr %s192, 8
        %s194 = scalar_lea.vmem [#allocation7], %s193
        %s195 = smul.u32 2, %s25
        %s196 = smul.u32 2, %s25
        %v198 = vld [vmem:[#allocation2] sm:$0x3]
        %v199 = vld [vmem:[%s173] sm:$0xff]
        %v200 = vmul.f32 %v199, %v199
        %202 = vst [vmem:[#allocation1] ss:$2 sm:$0xff] %v200
        %v203 = vld.sshfl [vmem:[#allocation1] sm:$0xff pattern:$0x75316420]
        %v204 = vld.sshfl [vmem:[#allocation1 + $0x8] sm:$0xff pattern:$0x75316420]
        %v207 = vpack.c.bf16 %v203, %v203
        %v208 = vpack.c.bf16 %v204, %v204
        %vm209 = vcmask 31744
        %v211 = vsel %vm209, %v198, 0
        %vm213 = vcmask 1041408
        %v215 = vsel %vm213, %v207, 0
        %v218 = vsel %vm213, %v208, 0
        %220 = vmatpush.bf16.msra.mxu0 0
        %221 = vmatpush.bf16.msra.mxu0 0
        %222 = vmatpush.bf16.msra.mxu0 0
        %223 = vmatpush.bf16.msra.mxu0 0
        %224 = vmatpush.bf16.msra.mxu0 0
        %225 = vmatpush.bf16.msra.mxu0 0
        %226 = vmatpush.bf16.msra.mxu0 0
        %227 = vmatpush.bf16.msra.mxu0 %v215
        %228 = vmatmul.bf16.gmra.mxu0 %v211
        %v229 = vpop.f32.mrf.mxu0
        %v230 = vadd.f32 0.0, %v229
        %v231 = vpop.f32.mrf.mxu0
        %232 = vdwg.mxu0
        %233 = vmatpush.bf16.msra.mxu0 0
        %234 = vmatpush.bf16.msra.mxu0 0
        %235 = vmatpush.bf16.msra.mxu0 0
        %236 = vmatpush.bf16.msra.mxu0 0
        %237 = vmatpush.bf16.msra.mxu0 0
        %238 = vmatpush.bf16.msra.mxu0 0
        %239 = vmatpush.bf16.msra.mxu0 0
        %240 = vmatpush.bf16.msra.mxu0 %v218
        %241 = vmatmul.bf16.gmra.mxu0 %v211
        %v242 = vpop.f32.mrf.mxu0
        %v243 = vadd.f32 0.0, %v242
        %v244 = vpop.f32.mrf.mxu0
        %245 = vdwg.mxu0
        %v248 = vrot.slane %v243, 4
        %vm249 = vcmask 1043456
        %v250 = vsel %vm249, %v230, %v248
        %v252 = vadd.f32 %v200, %v250
        %v253 = vmul.f32 %v252, 0.00016666666
        %v254 = vadd.f32 %v253, 2.0
        %v255 = vpow.f32 %v254, -0.75
        %v256 = vmul.f32 %v199, %v255
        %257 = vst [vmem:[%s194] sm:$0xff] %v256
        %s258 = sand.u32 %s91, 1
        %s259 = scalar_lea.sflag [#allocation4], %s258
        %s260 = sand.u32 %s91, 1
        %s261 = smul.addr %s260, 8
        %s262 = scalar_lea.vmem [#allocation7], %s261
        // Predicated region
        $region37: #{tpu_custom_call.1} parent=27 // pred_check
          %p263 = pneg %p101
        $region38: #{tpu_custom_call.1} parent=27 // pred_check_branch
          %265 = sbr.rel (%p263) target = $region40
        $region39: #{tpu_custom_call.1} parent=27 // pred_region
          %s266 = smul.u32 2, %s25
          %268 = vsyncadd %s259, 0
          %s269 = smul.addr %s24, 2
          %s270 = sadd.s32 %s266, %s269
          %s271 = smul.addr %s270, 4
          %s272 = scalar_lea.hbm %s2, %s271
          %s274 = sshll.u32 %s262, 4
          %s275 = int_to_ptr.vmem [resolvable:$true] %s274
          %s276 = sshll.u32 %s272, 4
          %s277 = int_to_ptr.hbm [resolvable:$true] %s276
          %279 = dma.vmem_to_hbm [thread:$0]  %s275, 128, %s277, %s259
        $region40: #{tpu_custom_call.1} parent=27 // pred_fallthru
          _
      $region28: #{tpu_custom_call.1} parent=5 // pred_fallthru
        _
      %p280 = scmp.le.s32.totalorder 2, %s15
      // Predicated region
      $region41: #{tpu_custom_call.1} parent=5 // pred_check
        %p281 = pneg %p280
      $region42: #{tpu_custom_call.1} parent=5 // pred_check_branch
        %283 = sbr.rel (%p281) target = $region44
      $region43: #{tpu_custom_call.1} parent=5 // pred_region
        %s284 = ssub.s32 %s15, 2
        // Predicated region
        $region45: #{tpu_custom_call.1} parent=43 // pred_check
          %p285 = pneg %p107
        $region46: #{tpu_custom_call.1} parent=43 // pred_check_branch
          %287 = sbr.rel (%p285) target = $region48
        $region47: #{tpu_custom_call.1} parent=43 // pred_region
          %s288 = sand.u32 %s92, 1
          %s289 = scalar_lea.sflag [#allocation4], %s288
          %s290 = sand.u32 %s92, 1
          %s291 = smul.addr %s290, 8
          %s292 = scalar_lea.vmem [#allocation7], %s291
          %294 = dma.done %s289, 128
        $region48: #{tpu_custom_call.1} parent=43 // pred_fallthru
          _
      $region44: #{tpu_custom_call.1} parent=5 // pred_fallthru
        _
    $region6: #{tpu_custom_call.1} parent=1 // loop_footer
      %s19 = sadd.s32 1, %s15
    $region7: #{tpu_custom_call.1} parent=1 // loop_footer_branch
      %14 = sbr.rel target = $region3
    $region8: #{tpu_custom_call.1} parent=1 // loop_exit
      _
    %295 = vsyncpa [#allocation3], 1
    %s296 = scalar_lea.sflag [#allocation3], 1
    %297 = vsyncpa %s296, 1
    %298 = vsyncpa [#allocation6], 1
    %s299 = scalar_lea.sflag [#allocation6], 1
    %300 = vsyncpa %s299, 1
    %301 = vsyncpa [#allocation4], 1
    %s302 = scalar_lea.sflag [#allocation4], 1
    %303 = vsyncpa %s302, 1

</llo_original>
